<compile_context>
chip_gen: v7x
topology: tpu7x:2x2x1
jax: 0.10.0
libtpu: 0.0.40
codegen_flags: <defaults>
</compile_context>

<pallas_src>
import functools

import jax
import jax.numpy as jnp
import numpy as np
from jax.experimental import pallas as pl
from jax.experimental.pallas import tpu as pltpu


def _pairwise_ranker_kernel(xi_ref, xj_ref,
                            w1_ref, b1_ref,
                            w2_ref, b2_ref,
                            w3_ref,
                            out_ref, *, compute_dtype):
    """sigmoid(f(xi) - f(xj)) for one (TM, D) row tile.

    xi_ref/xj_ref: (TM, D) f32 tiles. Weights are VMEM-resident across the
    whole grid (constant index_map). w3 is a (1, H2) row so the last layer is
    a VPU multiply + lane reduction (no N=1 matmul on the MXU). Output is a
    lane-dense (1, TM) row.
    """
    tm = xi_ref.shape[0]

    # Cast weights once; matmuls run with bf16 operands, f32 accumulation.
    w1 = w1_ref[...].astype(compute_dtype)
    w2 = w2_ref[...].astype(compute_dtype)
    b1 = b1_ref[...]
    b2 = b2_ref[...]

    def hidden(x):
        h = jnp.dot(x.astype(compute_dtype), w1,
                    preferred_element_type=jnp.float32) + b1
        h = jnp.maximum(h, 0.0)                                     # ReLU
        h = jnp.dot(h.astype(compute_dtype), w2,
                    preferred_element_type=jnp.float32) + b2
        return jnp.maximum(h, 0.0)                                  # ReLU

    # Back-to-back passes through the shared weights (no concat copy).
    hd = hidden(xi_ref[...]) - hidden(xj_ref[...])                  # (TM, H2) f32

    # Final Linear(H2 -> 1) applied to the difference; b3 cancels.
    s = jnp.sum(hd * w3_ref[...], axis=-1, keepdims=True)           # (TM, 1)

    # Lane-dense store: (TM, 1) -> (1, TM) row (XLU relayout, idle slot).
    out_ref[...] = jax.nn.sigmoid(s).reshape(1, tm)


def _round_up(n, m):
    return ((n + m - 1) // m) * m


def pairwise_ranker(x_i, x_j, params, *, block_rows=1024,
                    compute_dtype=jnp.bfloat16):
    """P(x_i > x_j) = sigmoid(f(x_i) - f(x_j)); returns shape (B,)."""
    w1, b1, w2, b2, w3_row, b3 = params   # b3 cancels in the diff -> not passed
    del b3
    B, D = x_i.shape
    H1 = w1.shape[1]
    H2 = w2.shape[1]

    # Row-tile selection.
    #  * Single-step case: TM = whole (8-rounded) batch; lane-dense output is
    #    valid because the block equals the full array extent.
    #  * Multi-step case: TM must be a multiple of 128 so the (1, TM) output
    #    block stays lane-aligned.
    #  * v7x megacore: if a large batch fits one tile, split into >= 2 steps
    #    so both TensorCores get work (grid axis is "parallel").
    rows = _round_up(B, 8)
    if rows <= block_rows:
        TM = rows
        if TM >= 1024:
            TM = _round_up((TM + 1) // 2, 128)   # >= 2 grid steps on megacore
    else:
        TM = max(128, (block_rows // 128) * 128)
    Bp = _round_up(B, TM)

    if Bp != B:
        pad = ((0, Bp - B), (0, 0))
        x_i = jnp.pad(x_i, pad)
        x_j = jnp.pad(x_j, pad)

    grid = (Bp // TM,)

    row_spec = pl.BlockSpec((TM, D), lambda i: (i, 0))
    # Weights/biases: constant block index -> stay resident in VMEM across steps.
    w1_spec = pl.BlockSpec((D, H1), lambda i: (0, 0))
    b1_spec = pl.BlockSpec((1, H1), lambda i: (0, 0))
    w2_spec = pl.BlockSpec((H1, H2), lambda i: (0, 0))
    b2_spec = pl.BlockSpec((1, H2), lambda i: (0, 0))
    w3_spec = pl.BlockSpec((1, H2), lambda i: (0, 0))
    # Lane-dense output: (1, Bp) array, (1, TM) blocks along the lane axis.
    out_spec = pl.BlockSpec((1, TM), lambda i: (0, i))

    kernel = functools.partial(_pairwise_ranker_kernel,
                               compute_dtype=compute_dtype)

    out = pl.pallas_call(
        kernel,
        out_shape=jax.ShapeDtypeStruct((1, Bp), jnp.float32),
        grid=grid,
        in_specs=[row_spec, row_spec,
                  w1_spec, b1_spec, w2_spec, b2_spec, w3_spec],
        out_specs=out_spec,
        compiler_params=pltpu.CompilerParams(
            dimension_semantics=("parallel",)),
    )(x_i, x_j, w1, b1, w2, b2, w3_row)

    return out[0, :B]  # squeeze(-1), matching PyTorch forward()


def init_params(key, input_dim, hidden_dims=(128, 64)):
    """Deterministic init mimicking nn.Linear default (uniform +/- 1/sqrt(fan_in)).

    w1, w2 are (in_features, out_features); biases are (1, out). The final
    layer's weight is stored as a (1, H2) row (for the in-kernel VPU reduction)
    and its bias as (1, 1).
    """
    d_in, h1 = input_dim, hidden_dims[0]
    h2 = hidden_dims[1]

    def lin(key, fan_in, shape_w, shape_b):
        kw, kb = jax.random.split(key)
        bound = 1.0 / np.sqrt(fan_in)
        w = jax.random.uniform(kw, shape_w, jnp.float32, -bound, bound)
        b = jax.random.uniform(kb, shape_b, jnp.float32, -bound, bound)
        return w, b

    key, k1, k2, k3 = jax.random.split(key, 4)
    w1, b1 = lin(k1, d_in, (d_in, h1), (1, h1))
    w2, b2 = lin(k2, h1, (h1, h2), (1, h2))
    w3_row, b3 = lin(k3, h2, (1, h2), (1, 1))   # Linear(h2, 1), weight as row
    return (w1, b1, w2, b2, w3_row, b3)


def _reference_pairwise(x_i, x_j, params):
    """Pure-JAX reference (f32, PyTorch eval semantics)."""
    w1, b1, w2, b2, w3_row, b3 = params

    def score(x):
        h = jnp.maximum(x @ w1 + b1, 0.0)
        h = jnp.maximum(h @ w2 + b2, 0.0)
        return jnp.sum(h * w3_row, axis=-1) + b3[0, 0]

    return jax.nn.sigmoid(score(x_i) - score(x_j))


if __name__ == "__main__":
    key = jax.random.PRNGKey(0)
    k_param, k_xi, k_xj = jax.random.split(key, 3)

    B, D = 8, 32                      # small batch, input_dim=32
    params = init_params(k_param, input_dim=D, hidden_dims=(128, 64))

    x_i = jax.random.normal(k_xi, (B, D), jnp.float32)
    x_j = jax.random.normal(k_xj, (B, D), jnp.float32)

    ref = _reference_pairwise(x_i, x_j, params)

    # Exact-precision path (f32 matmul operands) -- tight tolerance.
    probs_f32 = pairwise_ranker(x_i, x_j, params, compute_dtype=jnp.float32)
    jax.block_until_ready(probs_f32)
    np.testing.assert_allclose(np.asarray(probs_f32), np.asarray(ref),
                               rtol=1e-5, atol=1e-5)

    # Default fast path (bf16 matmul operands, f32 accumulate) -- loose tolerance.
    probs = pairwise_ranker(x_i, x_j, params)
    jax.block_until_ready(probs)
    np.testing.assert_allclose(np.asarray(probs), np.asarray(ref),
                               rtol=2e-2, atol=2e-2)

    assert probs.shape == (B,)
    print("KERNEL_OK")
</pallas_src>

<mosaic_0001>
module attributes {stable_mosaic.version = 11 : i64} {
  func.func @_pairwise_ranker_kernel(%arg0: i32, %arg1: memref<8x32xf32, #tpu.memory_space<vmem>>, %arg2: memref<8x32xf32, #tpu.memory_space<vmem>>, %arg3: memref<32x128xf32, #tpu.memory_space<vmem>>, %arg4: memref<1x128xf32, #tpu.memory_space<vmem>>, %arg5: memref<128x64xf32, #tpu.memory_space<vmem>>, %arg6: memref<1x64xf32, #tpu.memory_space<vmem>>, %arg7: memref<1x64xf32, #tpu.memory_space<vmem>>, %arg8: memref<1x8xf32, #tpu.memory_space<vmem>>) attributes {dimension_semantics = [#tpu.dimension_semantics<parallel>], iteration_bounds = array<i64: 1>, scalar_prefetch = 0 : i64, scratch_operands = 0 : i64, tpu.core_type = #tpu.core_type<tc>, window_params = [{transform_indices = @transform_0, window_bounds = array<i64: 8, 32>}, {transform_indices = @transform_1, window_bounds = array<i64: 8, 32>}, {pipeline_mode = #tpu.pipeline_mode<synchronous>, transform_indices = @transform_2, window_bounds = array<i64: 32, 128>}, {pipeline_mode = #tpu.pipeline_mode<synchronous>, transform_indices = @transform_3, window_bounds = array<i64: 1, 128>}, {pipeline_mode = #tpu.pipeline_mode<synchronous>, transform_indices = @transform_4, window_bounds = array<i64: 128, 64>}, {pipeline_mode = #tpu.pipeline_mode<synchronous>, transform_indices = @transform_5, window_bounds = array<i64: 1, 64>}, {pipeline_mode = #tpu.pipeline_mode<synchronous>, transform_indices = @transform_6, window_bounds = array<i64: 1, 64>}, {transform_indices = @transform_7, window_bounds = array<i64: 1, 8>}]} {
    %c0 = arith.constant 0 : index
    %c0_0 = arith.constant 0 : index
    %0 = vector.load %arg3[%c0, %c0_0] : memref<32x128xf32, #tpu.memory_space<vmem>>, vector<32x128xf32>
    %c0_1 = arith.constant 0 : index
    %c0_2 = arith.constant 0 : index
    %1 = vector.load %arg5[%c0_1, %c0_2] : memref<128x64xf32, #tpu.memory_space<vmem>>, vector<128x64xf32>
    %c0_3 = arith.constant 0 : index
    %c0_4 = arith.constant 0 : index
    %2 = vector.load %arg4[%c0_3, %c0_4] : memref<1x128xf32, #tpu.memory_space<vmem>>, vector<1x128xf32>
    %c0_5 = arith.constant 0 : index
    %c0_6 = arith.constant 0 : index
    %3 = vector.load %arg6[%c0_5, %c0_6] : memref<1x64xf32, #tpu.memory_space<vmem>>, vector<1x64xf32>
    %c0_7 = arith.constant 0 : index
    %c0_8 = arith.constant 0 : index
    %4 = vector.load %arg1[%c0_7, %c0_8] : memref<8x32xf32, #tpu.memory_space<vmem>>, vector<8x32xf32>
    %cst = arith.constant dense<0.000000e+00> : vector<8x128xf32>
    %5 = tpu.matmul %4, %0, %cst {dimension_numbers = #tpu.dot_dimension_numbers<[1], [0], [0], [1], [0, 0, 1, 1], [], []>} : vector<8x32xf32>, vector<32x128xf32>, vector<8x128xf32> -> vector<8x128xf32>
    %6 = vector.broadcast %2 : vector<1x128xf32> to vector<8x128xf32>
    %7 = arith.addf %5, %6 : vector<8x128xf32>
    %cst_9 = arith.constant 0.000000e+00 : f32
    %8 = vector.broadcast %cst_9 : f32 to vector<8x128xf32>
    %9 = arith.maximumf %7, %8 : vector<8x128xf32>
    %cst_10 = arith.constant dense<0.000000e+00> : vector<8x64xf32>
    %10 = tpu.matmul %9, %1, %cst_10 {dimension_numbers = #tpu.dot_dimension_numbers<[1], [0], [0], [1], [0, 0, 1, 1], [], []>} : vector<8x128xf32>, vector<128x64xf32>, vector<8x64xf32> -> vector<8x64xf32>
    %11 = vector.broadcast %3 : vector<1x64xf32> to vector<8x64xf32>
    %12 = arith.addf %10, %11 : vector<8x64xf32>
    %cst_11 = arith.constant 0.000000e+00 : f32
    %13 = vector.broadcast %cst_11 : f32 to vector<8x64xf32>
    %14 = arith.maximumf %12, %13 : vector<8x64xf32>
    %c0_12 = arith.constant 0 : index
    %c0_13 = arith.constant 0 : index
    %15 = vector.load %arg2[%c0_12, %c0_13] : memref<8x32xf32, #tpu.memory_space<vmem>>, vector<8x32xf32>
    %cst_14 = arith.constant dense<0.000000e+00> : vector<8x128xf32>
    %16 = tpu.matmul %15, %0, %cst_14 {dimension_numbers = #tpu.dot_dimension_numbers<[1], [0], [0], [1], [0, 0, 1, 1], [], []>} : vector<8x32xf32>, vector<32x128xf32>, vector<8x128xf32> -> vector<8x128xf32>
    %17 = vector.broadcast %2 : vector<1x128xf32> to vector<8x128xf32>
    %18 = arith.addf %16, %17 : vector<8x128xf32>
    %cst_15 = arith.constant 0.000000e+00 : f32
    %19 = vector.broadcast %cst_15 : f32 to vector<8x128xf32>
    %20 = arith.maximumf %18, %19 : vector<8x128xf32>
    %cst_16 = arith.constant dense<0.000000e+00> : vector<8x64xf32>
    %21 = tpu.matmul %20, %1, %cst_16 {dimension_numbers = #tpu.dot_dimension_numbers<[1], [0], [0], [1], [0, 0, 1, 1], [], []>} : vector<8x128xf32>, vector<128x64xf32>, vector<8x64xf32> -> vector<8x64xf32>
    %22 = vector.broadcast %3 : vector<1x64xf32> to vector<8x64xf32>
    %23 = arith.addf %21, %22 : vector<8x64xf32>
    %cst_17 = arith.constant 0.000000e+00 : f32
    %24 = vector.broadcast %cst_17 : f32 to vector<8x64xf32>
    %25 = arith.maximumf %23, %24 : vector<8x64xf32>
    %26 = arith.subf %14, %25 : vector<8x64xf32>
    %c0_18 = arith.constant 0 : index
    %c0_19 = arith.constant 0 : index
    %27 = vector.load %arg7[%c0_18, %c0_19] : memref<1x64xf32, #tpu.memory_space<vmem>>, vector<1x64xf32>
    %28 = vector.broadcast %27 : vector<1x64xf32> to vector<8x64xf32>
    %29 = arith.mulf %26, %28 : vector<8x64xf32>
    %cst_20 = arith.constant dense<0.000000e+00> : vector<8xf32>
    %30 = vector.multi_reduction <add>, %29, %cst_20 [1] : vector<8x64xf32> to vector<8xf32>
    %31 = vector.shape_cast %30 : vector<8xf32> to vector<8x1xf32>
    %32 = arith.negf %31 : vector<8x1xf32>
    %33 = math.exp %32 : vector<8x1xf32>
    %cst_21 = arith.constant 1.000000e+00 : f32
    %34 = vector.broadcast %cst_21 : f32 to vector<8x1xf32>
    %35 = arith.addf %34, %33 : vector<8x1xf32>
    %36 = arith.divf %34, %35 : vector<8x1xf32>
    %37 = vector.shape_cast %36 : vector<8x1xf32> to vector<1x8xf32>
    %c0_22 = arith.constant 0 : index
    %c0_23 = arith.constant 0 : index
    %38 = vector.load %arg8[%c0_22, %c0_23] : memref<1x8xf32, #tpu.memory_space<vmem>>, vector<1x8xf32>
    tpu.vector_store %arg8[%c0_22, %c0_23], %37 {strides = array<i32>} : memref<1x8xf32, #tpu.memory_space<vmem>>, vector<1x8xf32>,
    return
  }
  func.func @transform_0(%arg0: i32) -> (i32, i32) {
    %c0_i32 = arith.constant 0 : i32
    %c0_i32_0 = arith.constant 0 : i32
    return %arg0, %c0_i32 : i32, i32
  }
  func.func @transform_1(%arg0: i32) -> (i32, i32) {
    %c0_i32 = arith.constant 0 : i32
    %c0_i32_0 = arith.constant 0 : i32
    return %arg0, %c0_i32 : i32, i32
  }
  func.func @transform_2(%arg0: i32) -> (i32, i32) {
    %c0_i32 = arith.constant 0 : i32
    %c0_i32_0 = arith.constant 0 : i32
    %c0_i32_1 = arith.constant 0 : i32
    return %c0_i32, %c0_i32_0 : i32, i32
  }
  func.func @transform_3(%arg0: i32) -> (i32, i32) {
    %c0_i32 = arith.constant 0 : i32
    %c0_i32_0 = arith.constant 0 : i32
    %c0_i32_1 = arith.constant 0 : i32
    return %c0_i32, %c0_i32_0 : i32, i32
  }
  func.func @transform_4(%arg0: i32) -> (i32, i32) {
    %c0_i32 = arith.constant 0 : i32
    %c0_i32_0 = arith.constant 0 : i32
    %c0_i32_1 = arith.constant 0 : i32
    return %c0_i32, %c0_i32_0 : i32, i32
  }
  func.func @transform_5(%arg0: i32) -> (i32, i32) {
    %c0_i32 = arith.constant 0 : i32
    %c0_i32_0 = arith.constant 0 : i32
    %c0_i32_1 = arith.constant 0 : i32
    return %c0_i32, %c0_i32_0 : i32, i32
  }
  func.func @transform_6(%arg0: i32) -> (i32, i32) {
    %c0_i32 = arith.constant 0 : i32
    %c0_i32_0 = arith.constant 0 : i32
    %c0_i32_1 = arith.constant 0 : i32
    return %c0_i32, %c0_i32_0 : i32, i32
  }
  func.func @transform_7(%arg0: i32) -> (i32, i32) {
    %c0_i32 = arith.constant 0 : i32
    %c0_i32_0 = arith.constant 0 : i32
    return %c0_i32, %arg0 : i32, i32
  }
}

</mosaic_0001>

<llo_original>
// kernel: tpu_custom_call.1
$region0: #{tpu_custom_call.1}
  #allocation0 [shape = 'u32[]', space=smem, size = 0x4, offset = 0x4, fixed_abs, tag = 'smem constant byte address 0x4 - core index']
  #allocation1 [shape = 'u32[144,128]{1,0:T(1,128)}', space=vmem, size = 0x12000, scoped, tag = 'internal scratch']
  %s0 = inlined_call_operand.vmem [shape: f32[8,32], index: 0, kind: input, shape index: {}]
  %s1 = inlined_call_operand.vmem [shape: f32[8,32], index: 1, kind: input, shape index: {}]
  %s2 = inlined_call_operand.vmem [shape: f32[32,128], index: 2, kind: input, shape index: {}]
  %s3 = inlined_call_operand.vmem [shape: f32[1,128], index: 3, kind: input, shape index: {}]
  %s4 = inlined_call_operand.vmem [shape: f32[128,64], index: 4, kind: input, shape index: {}]
  %s5 = inlined_call_operand.vmem [shape: f32[1,64], index: 5, kind: input, shape index: {}]
  %s6 = inlined_call_operand.vmem [shape: f32[1,64], index: 6, kind: input, shape index: {}]
  %s7 = inlined_call_operand.hbm [shape: f32[1,8], index: 7, kind: output, shape index: {}]
  %s8 = sld [smem:[#allocation0]]
  $region38: #{tpu_custom_call.1} parent=0
    _
  %s10 = ssub.s32 1, %s8
  %s11 = scalar_select 0, %s10, %s8
  $region1: #{tpu_custom_call.1} parent=0
    #allocation2 [shape = 'u8[512]{0}', space=vmem, size = 0x400, scoped, tag = 'output window, operand 0, single buffered']
    #allocation3 [shape = 's32[1]{0}', space=sflag, size = 0x4, scoped, tag = 'scoped memory for tpu_custom_call.1']
    %12 = vsyncpa [#allocation3], 0
    // Predicated region
    $region2: #{tpu_custom_call.1} parent=1 // pred_check
      _
    $region3: #{tpu_custom_call.1} parent=1 // pred_check_branch
      %14 = sbr.rel (0) target = $region5
    $region4: #{tpu_custom_call.1} parent=1 // pred_region
      _
    $region5: #{tpu_custom_call.1} parent=1 // pred_fallthru
      _
    // Predicated region
    $region6: #{tpu_custom_call.1} parent=1 // pred_check
      _
    $region7: #{tpu_custom_call.1} parent=1 // pred_check_branch
      %16 = sbr.rel (0) target = $region9
    $region8: #{tpu_custom_call.1} parent=1 // pred_region
      _
    $region9: #{tpu_custom_call.1} parent=1 // pred_fallthru
      _
    // Predicated region
    $region10: #{tpu_custom_call.1} parent=1 // pred_check
      _
    $region11: #{tpu_custom_call.1} parent=1 // pred_check_branch
      %18 = sbr.rel (0) target = $region13
    $region12: #{tpu_custom_call.1} parent=1 // pred_region
      _
    $region13: #{tpu_custom_call.1} parent=1 // pred_fallthru
      _
    // Predicated region
    $region14: #{tpu_custom_call.1} parent=1 // pred_check
      _
    $region15: #{tpu_custom_call.1} parent=1 // pred_check_branch
      %20 = sbr.rel (0) target = $region17
    $region16: #{tpu_custom_call.1} parent=1 // pred_region
      _
    $region17: #{tpu_custom_call.1} parent=1 // pred_fallthru
      _
    // Predicated region
    $region18: #{tpu_custom_call.1} parent=1 // pred_check
      _
    $region19: #{tpu_custom_call.1} parent=1 // pred_check_branch
      %22 = sbr.rel (0) target = $region21
    $region20: #{tpu_custom_call.1} parent=1 // pred_region
      _
    $region21: #{tpu_custom_call.1} parent=1 // pred_fallthru
      _
    // Predicated region
    $region22: #{tpu_custom_call.1} parent=1 // pred_check
      _
    $region23: #{tpu_custom_call.1} parent=1 // pred_check_branch
      %24 = sbr.rel (0) target = $region25
    $region24: #{tpu_custom_call.1} parent=1 // pred_region
      _
    $region25: #{tpu_custom_call.1} parent=1 // pred_fallthru
      _
    // Predicated region
    $region26: #{tpu_custom_call.1} parent=1 // pred_check
      _
    $region27: #{tpu_custom_call.1} parent=1 // pred_check_branch
      %26 = sbr.rel (0) target = $region29
    $region28: #{tpu_custom_call.1} parent=1 // pred_region
      _
    $region29: #{tpu_custom_call.1} parent=1 // pred_fallthru
      _
    %v27 = vld [vmem:[%s2] sm:$0xff]
    %v28 = vld [vmem:[%s2 + $0x8] sm:$0xff]
    %v29 = vld [vmem:[%s2 + $0x10] sm:$0xff]
    %v30 = vld [vmem:[%s2 + $0x18] sm:$0xff]
    %v31 = vld [vmem:[%s4] sm:$0xff]
    %v32 = vld [vmem:[%s4 + $0x8] sm:$0xff]
    %v33 = vld [vmem:[%s4 + $0x10] sm:$0xff]
    %v34 = vld [vmem:[%s4 + $0x18] sm:$0xff]
    %v35 = vld [vmem:[%s4 + $0x20] sm:$0xff]
    %v36 = vld [vmem:[%s4 + $0x28] sm:$0xff]
    %v37 = vld [vmem:[%s4 + $0x30] sm:$0xff]
    %v38 = vld [vmem:[%s4 + $0x38] sm:$0xff]
    %v39 = vld [vmem:[%s4 + $0x40] sm:$0xff]
    %v40 = vld [vmem:[%s4 + $0x48] sm:$0xff]
    %v41 = vld [vmem:[%s4 + $0x50] sm:$0xff]
    %v42 = vld [vmem:[%s4 + $0x58] sm:$0xff]
    %v43 = vld [vmem:[%s4 + $0x60] sm:$0xff]
    %v44 = vld [vmem:[%s4 + $0x68] sm:$0xff]
    %v45 = vld [vmem:[%s4 + $0x70] sm:$0xff]
    %v46 = vld [vmem:[%s4 + $0x78] sm:$0xff]
    %v47 = vld [vmem:[%s3] sm:$0x1]
    %v48 = vld [vmem:[%s5] sm:$0x1]
    %v49 = vld [vmem:[%s0] sm:$0xff]
    %v51 = vlaneseq
    %v52 = vshrl.u32 %v51, 7
    %v53 = vsub.s32 0, %v52
    %v54 = vrot.slane %v47, %v53
    %vm56 = vcmask 261120
    %v58 = vsel %vm56, %v49, 0
    %60 = vmatprep.subr.mxu0 0.0
    %61 = vmatpush1.msra.mxu0 %v27
    %62 = vmatprep.subr.mxu0 0.0
    %63 = vmatpush1.msra.mxu0 %v28
    %64 = vmatprep.subr.mxu0 0.0
    %65 = vmatpush1.msra.mxu0 %v29
    %66 = vmatprep.subr.mxu0 0.0
    %67 = vmatpush1.msra.mxu0 %v30
    %68 = vmatprep.subr.mxu0 0.0
    %69 = vmatpush1.msra.mxu0 0.0
    %70 = vmatprep.subr.mxu0 0.0
    %71 = vmatpush1.msra.mxu0 0.0
    %72 = vmatprep.subr.mxu0 0.0
    %73 = vmatpush1.msra.mxu0 0.0
    %74 = vmatprep.subr.mxu0 0.0
    %75 = vmatpush1.msra.mxu0 0.0
    %76 = vmatprep.subr.mxu0 0.0
    %77 = vmatpush1.msra.mxu0 0.0
    %78 = vmatprep.subr.mxu0 0.0
    %79 = vmatpush1.msra.mxu0 0.0
    %80 = vmatprep.subr.mxu0 0.0
    %81 = vmatpush1.msra.mxu0 0.0
    %82 = vmatprep.subr.mxu0 0.0
    %83 = vmatpush1.msra.mxu0 0.0
    %84 = vmatprep.subr.mxu0 0.0
    %85 = vmatpush1.msra.mxu0 0.0
    %86 = vmatprep.subr.mxu0 0.0
    %87 = vmatpush1.msra.mxu0 0.0
    %88 = vmatprep.subr.mxu0 0.0
    %89 = vmatpush1.msra.mxu0 0.0
    %90 = vmatprep.subr.mxu0 0.0
    %91 = vmatpush1.msra.mxu0 0.0
    %92 = vmatprep.subr.mxu0 0.0
    %93 = vmatpush1.msra.mxu0 0.0
    %94 = vmatprep.subr.mxu0 0.0
    %95 = vmatpush1.msra.mxu0 0.0
    %96 = vmatprep.subr.mxu0 0.0
    %97 = vmatpush1.msra.mxu0 0.0
    %98 = vmatprep.subr.mxu0 0.0
    %99 = vmatpush1.msra.mxu0 0.0
    %100 = vmatprep.subr.mxu0 0.0
    %101 = vmatpush1.msra.mxu0 0.0
    %102 = vmatprep.subr.mxu0 0.0
    %103 = vmatpush1.msra.mxu0 0.0
    %104 = vmatprep.subr.mxu0 0.0
    %105 = vmatpush1.msra.mxu0 0.0
    %106 = vmatprep.subr.mxu0 0.0
    %107 = vmatpush1.msra.mxu0 0.0
    %108 = vmatprep.subr.mxu0 0.0
    %109 = vmatpush1.msra.mxu0 0.0
    %110 = vmatprep.subr.mxu0 0.0
    %111 = vmatpush1.msra.mxu0 0.0
    %112 = vmatprep.subr.mxu0 0.0
    %113 = vmatpush1.msra.mxu0 0.0
    %114 = vmatprep.subr.mxu0 0.0
    %115 = vmatpush1.msra.mxu0 0.0
    %116 = vmatprep.subr.mxu0 0.0
    %117 = vmatpush1.msra.mxu0 0.0
    %118 = vmatprep.subr.mxu0 0.0
    %119 = vmatpush1.msra.mxu0 0.0
    %120 = vmatprep.subr.mxu0 0.0
    %121 = vmatpush1.msra.mxu0 0.0
    %122 = vmatprep.subr.mxu0 0.0
    %123 = vmatpush1.msra.mxu0 0.0
    %124 = vmatprep.mubr.f32.mxu0 0.0
    %125 = vmatmul.mubr.f32.gmra.mrb[0].mxu0 %v58
    %v126 = vpop.f32.mrb[0].mxu0
    %v127 = vadd.f32 %v54, %v126
    %v128 = vpop.f32.mrb[0].mxu0
    %129 = vdwg.mxu0
    %v130 = vmax.f32 %v127, 0.0
    %v132 = vlaneseq
    %v133 = vshrl.u32 %v132, 7
    %v134 = vsub.s32 0, %v133
    %v135 = vrot.slane %v48, %v134
    %137 = vmatprep.subr.mxu0 0.0
    %138 = vmatpush1.msra.mxu0 %v31
    %139 = vmatprep.subr.mxu0 0.0
    %140 = vmatpush1.msra.mxu0 %v32
    %141 = vmatprep.subr.mxu0 0.0
    %142 = vmatpush1.msra.mxu0 %v33
    %143 = vmatprep.subr.mxu0 0.0
    %144 = vmatpush1.msra.mxu0 %v34
    %145 = vmatprep.subr.mxu0 0.0
    %146 = vmatpush1.msra.mxu0 %v35
    %147 = vmatprep.subr.mxu0 0.0
    %148 = vmatpush1.msra.mxu0 %v36
    %149 = vmatprep.subr.mxu0 0.0
    %150 = vmatpush1.msra.mxu0 %v37
    %151 = vmatprep.subr.mxu0 0.0
    %152 = vmatpush1.msra.mxu0 %v38
    %153 = vmatprep.subr.mxu0 0.0
    %154 = vmatpush1.msra.mxu0 %v39
    %155 = vmatprep.subr.mxu0 0.0
    %156 = vmatpush1.msra.mxu0 %v40
    %157 = vmatprep.subr.mxu0 0.0
    %158 = vmatpush1.msra.mxu0 %v41
    %159 = vmatprep.subr.mxu0 0.0
    %160 = vmatpush1.msra.mxu0 %v42
    %161 = vmatprep.subr.mxu0 0.0
    %162 = vmatpush1.msra.mxu0 %v43
    %163 = vmatprep.subr.mxu0 0.0
    %164 = vmatpush1.msra.mxu0 %v44
    %165 = vmatprep.subr.mxu0 0.0
    %166 = vmatpush1.msra.mxu0 %v45
    %167 = vmatprep.subr.mxu0 0.0
    %168 = vmatpush1.msra.mxu0 %v46
    %169 = vmatprep.subr.mxu0 0.0
    %170 = vmatpush1.msra.mxu0 0.0
    %171 = vmatprep.subr.mxu0 0.0
    %172 = vmatpush1.msra.mxu0 0.0
    %173 = vmatprep.subr.mxu0 0.0
    %174 = vmatpush1.msra.mxu0 0.0
    %175 = vmatprep.subr.mxu0 0.0
    %176 = vmatpush1.msra.mxu0 0.0
    %177 = vmatprep.subr.mxu0 0.0
    %178 = vmatpush1.msra.mxu0 0.0
    %179 = vmatprep.subr.mxu0 0.0
    %180 = vmatpush1.msra.mxu0 0.0
    %181 = vmatprep.subr.mxu0 0.0
    %182 = vmatpush1.msra.mxu0 0.0
    %183 = vmatprep.subr.mxu0 0.0
    %184 = vmatpush1.msra.mxu0 0.0
    %185 = vmatprep.subr.mxu0 0.0
    %186 = vmatpush1.msra.mxu0 0.0
    %187 = vmatprep.subr.mxu0 0.0
    %188 = vmatpush1.msra.mxu0 0.0
    %189 = vmatprep.subr.mxu0 0.0
    %190 = vmatpush1.msra.mxu0 0.0
    %191 = vmatprep.subr.mxu0 0.0
    %192 = vmatpush1.msra.mxu0 0.0
    %193 = vmatprep.subr.mxu0 0.0
    %194 = vmatpush1.msra.mxu0 0.0
    %195 = vmatprep.subr.mxu0 0.0
    %196 = vmatpush1.msra.mxu0 0.0
    %197 = vmatprep.subr.mxu0 0.0
    %198 = vmatpush1.msra.mxu0 0.0
    %199 = vmatprep.subr.mxu0 0.0
    %200 = vmatpush1.msra.mxu0 0.0
    %201 = vmatprep.mubr.f32.mxu0 0.0
    %202 = vmatmul.mubr.f32.gmra.mrb[0].mxu0 %v130
    %v203 = vpop.f32.mrb[0].mxu0
    %v204 = vadd.f32 %v135, %v203
    %v205 = vpop.f32.mrb[0].mxu0
    %206 = vdwg.mxu0
    %v207 = vmax.f32 %v204, 0.0
    %v208 = vld [vmem:[%s1] sm:$0xff]
    %v210 = vsel %vm56, %v208, 0
    %212 = vmatprep.subr.mxu0 0.0
    %213 = vmatpush1.msra.mxu0 %v27
    %214 = vmatprep.subr.mxu0 0.0
    %215 = vmatpush1.msra.mxu0 %v28
    %216 = vmatprep.subr.mxu0 0.0
    %217 = vmatpush1.msra.mxu0 %v29
    %218 = vmatprep.subr.mxu0 0.0
    %219 = vmatpush1.msra.mxu0 %v30
    %220 = vmatprep.subr.mxu0 0.0
    %221 = vmatpush1.msra.mxu0 0.0
    %222 = vmatprep.subr.mxu0 0.0
    %223 = vmatpush1.msra.mxu0 0.0
    %224 = vmatprep.subr.mxu0 0.0
    %225 = vmatpush1.msra.mxu0 0.0
    %226 = vmatprep.subr.mxu0 0.0
    %227 = vmatpush1.msra.mxu0 0.0
    %228 = vmatprep.subr.mxu0 0.0
    %229 = vmatpush1.msra.mxu0 0.0
    %230 = vmatprep.subr.mxu0 0.0
    %231 = vmatpush1.msra.mxu0 0.0
    %232 = vmatprep.subr.mxu0 0.0
    %233 = vmatpush1.msra.mxu0 0.0
    %234 = vmatprep.subr.mxu0 0.0
    %235 = vmatpush1.msra.mxu0 0.0
    %236 = vmatprep.subr.mxu0 0.0
    %237 = vmatpush1.msra.mxu0 0.0
    %238 = vmatprep.subr.mxu0 0.0
    %239 = vmatpush1.msra.mxu0 0.0
    %240 = vmatprep.subr.mxu0 0.0
    %241 = vmatpush1.msra.mxu0 0.0
    %242 = vmatprep.subr.mxu0 0.0
    %243 = vmatpush1.msra.mxu0 0.0
    %244 = vmatprep.subr.mxu0 0.0
    %245 = vmatpush1.msra.mxu0 0.0
    %246 = vmatprep.subr.mxu0 0.0
    %247 = vmatpush1.msra.mxu0 0.0
    %248 = vmatprep.subr.mxu0 0.0
    %249 = vmatpush1.msra.mxu0 0.0
    %250 = vmatprep.subr.mxu0 0.0
    %251 = vmatpush1.msra.mxu0 0.0
    %252 = vmatprep.subr.mxu0 0.0
    %253 = vmatpush1.msra.mxu0 0.0
    %254 = vmatprep.subr.mxu0 0.0
    %255 = vmatpush1.msra.mxu0 0.0
    %256 = vmatprep.subr.mxu0 0.0
    %257 = vmatpush1.msra.mxu0 0.0
    %258 = vmatprep.subr.mxu0 0.0
    %259 = vmatpush1.msra.mxu0 0.0
    %260 = vmatprep.subr.mxu0 0.0
    %261 = vmatpush1.msra.mxu0 0.0
    %262 = vmatprep.subr.mxu0 0.0
    %263 = vmatpush1.msra.mxu0 0.0
    %264 = vmatprep.subr.mxu0 0.0
    %265 = vmatpush1.msra.mxu0 0.0
    %266 = vmatprep.subr.mxu0 0.0
    %267 = vmatpush1.msra.mxu0 0.0
    %268 = vmatprep.subr.mxu0 0.0
    %269 = vmatpush1.msra.mxu0 0.0
    %270 = vmatprep.subr.mxu0 0.0
    %271 = vmatpush1.msra.mxu0 0.0
    %272 = vmatprep.subr.mxu0 0.0
    %273 = vmatpush1.msra.mxu0 0.0
    %274 = vmatprep.subr.mxu0 0.0
    %275 = vmatpush1.msra.mxu0 0.0
    %276 = vmatprep.mubr.f32.mxu0 0.0
    %277 = vmatmul.mubr.f32.gmra.mrb[0].mxu0 %v210
    %v278 = vpop.f32.mrb[0].mxu0
    %v279 = vadd.f32 %v54, %v278
    %v280 = vpop.f32.mrb[0].mxu0
    %281 = vdwg.mxu0
    %v282 = vmax.f32 %v279, 0.0
    %283 = vmatprep.subr.mxu0 0.0
    %284 = vmatpush1.msra.mxu0 %v31
    %285 = vmatprep.subr.mxu0 0.0
    %286 = vmatpush1.msra.mxu0 %v32
    %287 = vmatprep.subr.mxu0 0.0
    %288 = vmatpush1.msra.mxu0 %v33
    %289 = vmatprep.subr.mxu0 0.0
    %290 = vmatpush1.msra.mxu0 %v34
    %291 = vmatprep.subr.mxu0 0.0
    %292 = vmatpush1.msra.mxu0 %v35
    %293 = vmatprep.subr.mxu0 0.0
    %294 = vmatpush1.msra.mxu0 %v36
    %295 = vmatprep.subr.mxu0 0.0
    %296 = vmatpush1.msra.mxu0 %v37
    %297 = vmatprep.subr.mxu0 0.0
    %298 = vmatpush1.msra.mxu0 %v38
    %299 = vmatprep.subr.mxu0 0.0
    %300 = vmatpush1.msra.mxu0 %v39
    %301 = vmatprep.subr.mxu0 0.0
    %302 = vmatpush1.msra.mxu0 %v40
    %303 = vmatprep.subr.mxu0 0.0
    %304 = vmatpush1.msra.mxu0 %v41
    %305 = vmatprep.subr.mxu0 0.0
    %306 = vmatpush1.msra.mxu0 %v42
    %307 = vmatprep.subr.mxu0 0.0
    %308 = vmatpush1.msra.mxu0 %v43
    %309 = vmatprep.subr.mxu0 0.0
    %310 = vmatpush1.msra.mxu0 %v44
    %311 = vmatprep.subr.mxu0 0.0
    %312 = vmatpush1.msra.mxu0 %v45
    %313 = vmatprep.subr.mxu0 0.0
    %314 = vmatpush1.msra.mxu0 %v46
    %315 = vmatprep.subr.mxu0 0.0
    %316 = vmatpush1.msra.mxu0 0.0
    %317 = vmatprep.subr.mxu0 0.0
    %318 = vmatpush1.msra.mxu0 0.0
    %319 = vmatprep.subr.mxu0 0.0
    %320 = vmatpush1.msra.mxu0 0.0
    %321 = vmatprep.subr.mxu0 0.0
    %322 = vmatpush1.msra.mxu0 0.0
    %323 = vmatprep.subr.mxu0 0.0
    %324 = vmatpush1.msra.mxu0 0.0
    %325 = vmatprep.subr.mxu0 0.0
    %326 = vmatpush1.msra.mxu0 0.0
    %327 = vmatprep.subr.mxu0 0.0
    %328 = vmatpush1.msra.mxu0 0.0
    %329 = vmatprep.subr.mxu0 0.0
    %330 = vmatpush1.msra.mxu0 0.0
    %331 = vmatprep.subr.mxu0 0.0
    %332 = vmatpush1.msra.mxu0 0.0
    %333 = vmatprep.subr.mxu0 0.0
    %334 = vmatpush1.msra.mxu0 0.0
    %335 = vmatprep.subr.mxu0 0.0
    %336 = vmatpush1.msra.mxu0 0.0
    %337 = vmatprep.subr.mxu0 0.0
    %338 = vmatpush1.msra.mxu0 0.0
    %339 = vmatprep.subr.mxu0 0.0
    %340 = vmatpush1.msra.mxu0 0.0
    %341 = vmatprep.subr.mxu0 0.0
    %342 = vmatpush1.msra.mxu0 0.0
    %343 = vmatprep.subr.mxu0 0.0
    %344 = vmatpush1.msra.mxu0 0.0
    %345 = vmatprep.subr.mxu0 0.0
    %346 = vmatpush1.msra.mxu0 0.0
    %347 = vmatprep.mubr.f32.mxu0 0.0
    %348 = vmatmul.mubr.f32.gmra.mrb[0].mxu0 %v282
    %v349 = vpop.f32.mrb[0].mxu0
    %v350 = vadd.f32 %v135, %v349
    %v351 = vpop.f32.mrb[0].mxu0
    %352 = vdwg.mxu0
    %v353 = vmax.f32 %v350, 0.0
    %v354 = vsub.f32 %v207, %v353
    %v355 = vld [vmem:[%s6] sm:$0x1]
    %v357 = vlaneseq
    %v358 = vshrl.u32 %v357, 7
    %v359 = vsub.s32 0, %v358
    %v360 = vrot.slane %v355, %v359
    %v362 = vmul.f32 %v354, %v360
    %vm363 = vcmask 523264
    %v364 = vsel %vm363, %v362, 0.0
    %365 = vadd.xlane.f32.xlu0 %v364
    %v366 = vpop.xlane.xlu0 %365
    %v367 = vxor.u32 %v366, 2147483648
    %v368 = vmul.f32 %v367, 1.442695
    %v369 = vpow.pop %v368
    %v370 = vadd.f32 %v369, 1.0
    %v371 = vrcp.pop %v370
    %v372 = vmul.f32 1.0, %v371
    %v374 = vlaneseq
    %v375 = vand.u32 %v374, 127
    %v376 = vlaneseq
    %v377 = vshrl.u32 %v376, 7
    %v378 = vsub.s32 %v375, %v377
    %v379 = vrot.slane %v372, %v378
    %vm381 = vcmask 57344
    %382 = vst.msk [vmem:[#allocation2] sm:$0x1] %vm381, %v379
    // Predicated region
    $region30: #{tpu_custom_call.1} parent=1 // pred_check
      _
    $region31: #{tpu_custom_call.1} parent=1 // pred_check_branch
      %384 = sbr.rel (0) target = $region33
    $region32: #{tpu_custom_call.1} parent=1 // pred_region
      %s386 = ssub.s32 16, 16
      %387 = vsyncadd [#allocation3], %s386
      %s389 = sshll.u32 [#allocation2], 4
      %s390 = int_to_ptr.vmem [resolvable:$true] %s389
      %392 = dma.vmem_to_hbm [thread:$0]  %s390, 16, %s7, [#allocation3]
    $region33: #{tpu_custom_call.1} parent=1 // pred_fallthru
      _
    // Predicated region
    $region34: #{tpu_custom_call.1} parent=1 // pred_check
      _
    $region35: #{tpu_custom_call.1} parent=1 // pred_check_branch
      %394 = sbr.rel (0) target = $region37
    $region36: #{tpu_custom_call.1} parent=1 // pred_region
      %395 = dma.done [#allocation3], 16
    $region37: #{tpu_custom_call.1} parent=1 // pred_fallthru
      _
    %396 = vsyncpa [#allocation3], 1

</llo_original>
